<compile_context>
chip_gen: v6e
topology: v6e:2x2x1
jax: 0.10.0
libtpu: 0.0.40
codegen_flags: <defaults>
</compile_context>

<pallas_src>
import jax
import jax.numpy as jnp
from jax.experimental import pallas as pl
from jax.experimental.pallas import tpu as pltpu


def _round_up(x, m):
    return ((x + m - 1) // m) * m


def _conv1x1_kernel(x_ref, w_ref, b_ref, o_ref):
    # x_ref: (C_in, T)   w_ref: (C_out, C_in)   b_ref: (C_out, 1)   o_ref: (C_out, T)
    acc = jnp.dot(w_ref[...], x_ref[...], preferred_element_type=jnp.float32)
    # Bias add stays in-kernel (free VPU filler on a mem-bound kernel).
    o_ref[...] = (acc + b_ref[...]).astype(o_ref.dtype)


def _pick_spatial_tile(hw, t_desired, c_in, c_out, itemsize, budget_bytes):
    """Choose (tile, padded_hw) — tile is a multiple of 128 dividing padded_hw."""
    hw128 = _round_up(hw, 128)
    # VMEM cap: double-buffered input + output tiles must fit the budget.
    max_t = budget_bytes // (2 * (c_in + c_out) * itemsize)
    max_t = max(128, (max_t // 128) * 128)
    t_cap = max(128, min((max(t_desired, 128) // 128) * 128, max_t))

    if hw128 <= t_cap:
        # Whole spatial extent in a single tile.
        return hw128, hw128

    # Largest multiple-of-128 divisor of hw128 that fits the cap: exact grid,
    # padding limited to <=127 columns (zero when hw is already 128-aligned).
    m = hw128 // 128
    g = 1
    for cand in range(t_cap // 128, 0, -1):
        if m % cand == 0:
            g = cand
            break
    t = g * 128
    if t >= t_cap // 4:
        return t, hw128
    # Awkward factorization (e.g. large prime * 128): prefer a big tile and
    # eat some spatial padding instead of thousands of tiny grid steps.
    return t_cap, _round_up(hw, t_cap)


def feature_map(x_nchw, weight, bias, *, t_hw=65536,
                vmem_tile_budget_bytes=16 * 1024 * 1024):
    """1x1 conv forward.

    x_nchw: (N, C_in, H, W)
    weight: (C_out, C_in)   (squeezed from PyTorch's (C_out, C_in, 1, 1))
    bias:   (C_out,)
    returns (N, C_out, H, W)
    """
    N, C_in, H, W = x_nchw.shape
    C_out = weight.shape[0]
    HW = H * W
    dtype = x_nchw.dtype
    itemsize = jnp.dtype(dtype).itemsize

    t, HW_pad = _pick_spatial_tile(HW, t_hw, C_in, C_out, itemsize,
                                   vmem_tile_budget_bytes)

    # ---- reshape (no data movement); pad spatial axis only if needed --------
    x_flat = x_nchw.reshape(N, C_in, HW)
    if HW_pad != HW:
        x_flat = jnp.pad(x_flat, ((0, 0), (0, 0), (0, HW_pad - HW)))

    w = weight.astype(dtype)                # (C_out, C_in), used as-is
    b_col = bias.reshape(C_out, 1)          # broadcast over lanes in-kernel

    grid = (N, HW_pad // t)

    out_flat = pl.pallas_call(
        _conv1x1_kernel,
        out_shape=jax.ShapeDtypeStruct((N, C_out, HW_pad), dtype),
        grid_spec=pltpu.PrefetchScalarGridSpec(
            num_scalar_prefetch=0,
            grid=grid,
            in_specs=[
                # Batch dim squeezed out; (C_in, T) tile, T on the lane axis.
                pl.BlockSpec((None, C_in, t), lambda n, j: (n, 0, j)),
                pl.BlockSpec((C_out, C_in), lambda n, j: (0, 0)),
                pl.BlockSpec((C_out, 1), lambda n, j: (0, 0)),
            ],
            out_specs=pl.BlockSpec((None, C_out, t), lambda n, j: (n, 0, j)),
        ),
        compiler_params=pltpu.CompilerParams(
            dimension_semantics=("parallel", "parallel"),
            vmem_limit_bytes=48 * 1024 * 1024,   # explicit; < v7x 64 MiB VMEM
        ),
    )(x_flat, w, b_col)

    # Drop spatial padding (if any) and restore NCHW.
    if HW_pad != HW:
        out_flat = out_flat[:, :, :HW]
    return out_flat.reshape(N, C_out, H, W)


def _reference(x, weight, bias):
    return jnp.einsum("nchw,oc->nohw", x, weight) + bias[None, :, None, None]


if __name__ == "__main__":
    key = jax.random.PRNGKey(0)
    k_x, k_w, k_b, k_x2, k_x3 = jax.random.split(key, 5)

    N, C_in, C_out, H, W = 2, 4, 8, 16, 16
    x = jax.random.normal(k_x, (N, C_in, H, W), dtype=jnp.float32)

    # Deterministic synthetic parameters (shapes match nn.Conv2d(C_in, C_out, 1)).
    bound = 1.0 / (C_in ** 0.5)
    weight = jax.random.uniform(k_w, (C_out, C_in), minval=-bound, maxval=bound,
                                dtype=jnp.float32)
    bias = jax.random.uniform(k_b, (C_out,), minval=-bound, maxval=bound,
                              dtype=jnp.float32)

    # 1) Aligned spatial, single tile.
    y = feature_map(x, weight, bias)
    jax.block_until_ready(y)
    y_ref = _reference(x, weight, bias)
    assert y.shape == (N, C_out, H, W)
    assert jnp.allclose(y, y_ref, atol=1e-5, rtol=1e-5)

    # 2) Non-128-aligned spatial path (pad to 128 multiple + slice back).
    H2, W2 = 15, 15
    x2 = jax.random.normal(k_x2, (N, C_in, H2, W2), dtype=jnp.float32)
    y2 = feature_map(x2, weight, bias)
    jax.block_until_ready(y2)
    y2_ref = _reference(x2, weight, bias)
    assert y2.shape == (N, C_out, H2, W2)
    assert jnp.allclose(y2, y2_ref, atol=1e-5, rtol=1e-5)

    # 3) Multi-tile spatial grid via the divisor path (forced small tile cap).
    H3, W3 = 48, 48      # HW = 2304 = 128*18; t_hw=512 -> tile 384, 6 tiles
    x3 = jax.random.normal(k_x3, (N, C_in, H3, W3), dtype=jnp.float32)
    y3 = feature_map(x3, weight, bias, t_hw=512)
    jax.block_until_ready(y3)
    y3_ref = _reference(x3, weight, bias)
    assert y3.shape == (N, C_out, H3, W3)
    assert jnp.allclose(y3, y3_ref, atol=1e-5, rtol=1e-5)

    print("KERNEL_OK")
</pallas_src>

<mosaic_0001>
module attributes {stable_mosaic.version = 11 : i64} {
  func.func @_conv1x1_kernel(%arg0: i32, %arg1: i32, %arg2: memref<1x4x256xf32, #tpu.memory_space<vmem>>, %arg3: memref<8x4xf32, #tpu.memory_space<vmem>>, %arg4: memref<8x1xf32, #tpu.memory_space<vmem>>, %arg5: memref<1x8x256xf32, #tpu.memory_space<vmem>>) attributes {dimension_semantics = [#tpu.dimension_semantics<parallel>, #tpu.dimension_semantics<parallel>], iteration_bounds = array<i64: 2, 1>, scalar_prefetch = 0 : i64, scratch_operands = 0 : i64, tpu.core_type = #tpu.core_type<tc>, window_params = [{transform_indices = @transform_0, window_bounds = array<i64: 1, 4, 256>}, {pipeline_mode = #tpu.pipeline_mode<synchronous>, transform_indices = @transform_1, window_bounds = array<i64: 8, 4>}, {pipeline_mode = #tpu.pipeline_mode<synchronous>, transform_indices = @transform_2, window_bounds = array<i64: 8, 1>}, {transform_indices = @transform_3, window_bounds = array<i64: 1, 8, 256>}]} {
    %c0 = arith.constant 0 : index
    %c0_0 = arith.constant 0 : index
    %0 = vector.load %arg3[%c0, %c0_0] : memref<8x4xf32, #tpu.memory_space<vmem>>, vector<8x4xf32>
    %c0_1 = arith.constant 0 : index
    %c0_2 = arith.constant 0 : index
    %c0_3 = arith.constant 0 : index
    %1 = vector.load %arg2[%c0_1, %c0_2, %c0_3] : memref<1x4x256xf32, #tpu.memory_space<vmem>>, vector<1x4x256xf32>
    %2 = vector.shape_cast %1 : vector<1x4x256xf32> to vector<4x256xf32>
    %cst = arith.constant dense<0.000000e+00> : vector<8x256xf32>
    %3 = tpu.matmul %0, %2, %cst {dimension_numbers = #tpu.dot_dimension_numbers<[1], [0], [0], [1], [0, 0, 1, 1], [], []>} : vector<8x4xf32>, vector<4x256xf32>, vector<8x256xf32> -> vector<8x256xf32>
    %c0_4 = arith.constant 0 : index
    %c0_5 = arith.constant 0 : index
    %4 = vector.load %arg4[%c0_4, %c0_5] : memref<8x1xf32, #tpu.memory_space<vmem>>, vector<8x1xf32>
    %5 = vector.broadcast %4 : vector<8x1xf32> to vector<8x256xf32>
    %6 = arith.addf %3, %5 : vector<8x256xf32>
    %c0_6 = arith.constant 0 : index
    %c0_7 = arith.constant 0 : index
    %c0_8 = arith.constant 0 : index
    %7 = vector.load %arg5[%c0_6, %c0_7, %c0_8] : memref<1x8x256xf32, #tpu.memory_space<vmem>>, vector<1x8x256xf32>
    %8 = vector.shape_cast %7 : vector<1x8x256xf32> to vector<8x256xf32>
    %9 = vector.shape_cast %6 : vector<8x256xf32> to vector<1x8x256xf32>
    tpu.vector_store %arg5[%c0_6, %c0_7, %c0_8], %9 {strides = array<i32>} : memref<1x8x256xf32, #tpu.memory_space<vmem>>, vector<1x8x256xf32>,
    return
  }
  func.func @transform_0(%arg0: i32, %arg1: i32) -> (i32, i32, i32) {
    %c0_i32 = arith.constant 0 : i32
    %c0_i32_0 = arith.constant 0 : i32
    return %arg0, %c0_i32, %arg1 : i32, i32, i32
  }
  func.func @transform_1(%arg0: i32, %arg1: i32) -> (i32, i32) {
    %c0_i32 = arith.constant 0 : i32
    %c0_i32_0 = arith.constant 0 : i32
    %c0_i32_1 = arith.constant 0 : i32
    return %c0_i32, %c0_i32_0 : i32, i32
  }
  func.func @transform_2(%arg0: i32, %arg1: i32) -> (i32, i32) {
    %c0_i32 = arith.constant 0 : i32
    %c0_i32_0 = arith.constant 0 : i32
    %c0_i32_1 = arith.constant 0 : i32
    return %c0_i32, %c0_i32_0 : i32, i32
  }
  func.func @transform_3(%arg0: i32, %arg1: i32) -> (i32, i32, i32) {
    %c0_i32 = arith.constant 0 : i32
    %c0_i32_0 = arith.constant 0 : i32
    return %arg0, %c0_i32, %arg1 : i32, i32, i32
  }
}

</mosaic_0001>

<llo_original>
// kernel: tpu_custom_call.1
$region0: #{tpu_custom_call.1}
  #allocation0 [shape = 'u32[]', space=smem, size = 0x4, offset = 0x4, fixed_abs, tag = 'smem constant byte address 0x4 - core index']
  #allocation1 [shape = 'u32[144,128]{1,0:T(1,128)}', space=vmem, size = 0x12000, scoped, tag = 'internal scratch']
  %s0 = inlined_call_operand.vmem [shape: f32[2,4,256], index: 0, kind: input, shape index: {}]
  %s1 = inlined_call_operand.vmem [shape: f32[8,4], index: 1, kind: input, shape index: {}]
  %s2 = inlined_call_operand.vmem [shape: f32[8,1], index: 2, kind: input, shape index: {}]
  %s3 = inlined_call_operand.hbm [shape: f32[2,8,256], index: 3, kind: output, shape index: {}]
  %s4 = sld [smem:[#allocation0]]
  $region45: #{tpu_custom_call.1} parent=0
    _
  %s6 = ssub.s32 1, %s4
  %s7 = scalar_select 0, %s6, %s4
  $region1: #{tpu_custom_call.1} parent=0
    #allocation2 [shape = 'u8[16384]{0}', space=vmem, size = 0x4000, scoped, tag = 'output window, operand 0']
    #allocation3 [shape = 's32[2]{0}', space=sflag, size = 0x8, scoped, tag = 'scoped memory for tpu_custom_call.1']
    %8 = vsyncpa [#allocation3], 0
    %s9 = scalar_lea.sflag [#allocation3], 1
    %10 = vsyncpa %s9, 0
    loop: start=0, step=1, limit=4
    $region2: #{tpu_custom_call.1} parent=1 // loop_pre_header
      _
    $region3: #{tpu_custom_call.1} parent=1 // loop_header
      %s12 = sphi 0, %s16
      %p13 = scmp.ge.s32.totalorder %s12, 4
      %s19 = sphi 0, %s31
      %s20 = sphi 0, %s27
      %s21 = sphi 0, %s19
      %s22 = sphi 0, %s20
      %s23 = sphi 0, %s21
      %s24 = sphi 0, %s22
      %s36 = sphi 0, %s38
      %s39 = sphi 0, %s36
      %s40 = sphi 0, %s39
      %s56 = sphi 0, %s40
      %s60 = sphi 0, %s60
      %s62 = sphi 0, %s60
      %s63 = sphi 0, %s62
      %s77 = sphi 0, %s63
      %s81 = sphi 0, %s81
      %s83 = sphi 0, %s81
      %s84 = sphi 0, %s83
      %s98 = sphi 0, %s84
      %s106 = sphi 0, %s108
      %s109 = sphi 0, %s106
      %s110 = sphi 0, %s109
      %s126 = sphi 0, %s110
    $region4: #{tpu_custom_call.1} parent=1 // loop_header_branch
      %15 = sbr.rel (%p13) target = $region8
    $region5: #{tpu_custom_call.1} parent=1 // loop_body
      %s17 = ssub.s32 %s12, 1
      %s18 = ssub.s32 %s12, 2
      %s25 = sadd.s32 1, %s20
      %p26 = scmp.ge.s32.totalorder %s25, 1
      %s27 = scalar_select %p26, 0, %s25
      %s28 = sadd.s32 1, %s19
      %s29 = scalar_select %p26, %s28, %s19
      %p30 = scmp.ge.s32.totalorder %s29, 2
      %s31 = scalar_select %p30, 0, %s29
      %s32 = ssub.s32 %s19, %s31
      %s33 = ssub.s32 %s20, %s27
      %s34 = sor.u32 %s32, %s33
      %p35 = scmp.eq.s32.totalorder %s34, 0
      %s37 = sadd.s32 %s36, 1
      %s38 = scalar_select %p35, %s36, %s37
      %p41 = pneg %p35
      %p42 = scmp.eq.s32.totalorder %s12, 1
      %p43 = por %p41, %p42
      %p44 = scmp.ne.s32.totalorder %s36, %s39
      %p45 = scmp.eq.s32.totalorder %s12, 0
      %p46 = por %p44, %p45
      %p47 = scmp.ne.s32.totalorder %s36, %s39
      %p48 = scmp.eq.s32.totalorder %s17, 1
      %p49 = por %p47, %p48
      %p50 = scmp.ne.s32.totalorder %s39, %s40
      %p51 = scmp.eq.s32.totalorder %s17, 0
      %p52 = por %p50, %p51
      %p53 = scmp.ne.s32.totalorder %s39, %s40
      %p54 = scmp.eq.s32.totalorder %s18, 1
      %p55 = por %p53, %p54
      %p57 = scmp.ne.s32.totalorder %s40, %s56
      %p58 = scmp.eq.s32.totalorder %s18, 0
      %p59 = por %p57, %p58
      %s61 = sadd.s32 %s60, 1
      %p64 = scmp.eq.s32.totalorder %s12, 1
      %p65 = scmp.ne.s32.totalorder %s60, %s62
      %p66 = scmp.eq.s32.totalorder %s12, 0
      %p67 = por %p65, %p66
      %p68 = scmp.ne.s32.totalorder %s60, %s62
      %p69 = scmp.eq.s32.totalorder %s17, 1
      %p70 = por %p68, %p69
      %p71 = scmp.ne.s32.totalorder %s62, %s63
      %p72 = scmp.eq.s32.totalorder %s17, 0
      %p73 = por %p71, %p72
      %p74 = scmp.ne.s32.totalorder %s62, %s63
      %p75 = scmp.eq.s32.totalorder %s18, 1
      %p76 = por %p74, %p75
      %p78 = scmp.ne.s32.totalorder %s63, %s77
      %p79 = scmp.eq.s32.totalorder %s18, 0
      %p80 = por %p78, %p79
      %s82 = sadd.s32 %s81, 1
      %p85 = scmp.eq.s32.totalorder %s12, 1
      %p86 = scmp.ne.s32.totalorder %s81, %s83
      %p87 = scmp.eq.s32.totalorder %s12, 0
      %p88 = por %p86, %p87
      %p89 = scmp.ne.s32.totalorder %s81, %s83
      %p90 = scmp.eq.s32.totalorder %s17, 1
      %p91 = por %p89, %p90
      %p92 = scmp.ne.s32.totalorder %s83, %s84
      %p93 = scmp.eq.s32.totalorder %s17, 0
      %p94 = por %p92, %p93
      %p95 = scmp.ne.s32.totalorder %s83, %s84
      %p96 = scmp.eq.s32.totalorder %s18, 1
      %p97 = por %p95, %p96
      %p99 = scmp.ne.s32.totalorder %s84, %s98
      %p100 = scmp.eq.s32.totalorder %s18, 0
      %p101 = por %p99, %p100
      %s102 = ssub.s32 %s19, %s31
      %s103 = ssub.s32 %s20, %s27
      %s104 = sor.u32 %s102, %s103
      %p105 = scmp.eq.s32.totalorder %s104, 0
      %s107 = sadd.s32 %s106, 1
      %s108 = scalar_select %p105, %s106, %s107
      %p111 = pneg %p105
      %p112 = scmp.eq.s32.totalorder %s12, 1
      %p113 = por %p111, %p112
      %p114 = scmp.ne.s32.totalorder %s106, %s109
      %p115 = scmp.eq.s32.totalorder %s12, 0
      %p116 = por %p114, %p115
      %p117 = scmp.ne.s32.totalorder %s106, %s109
      %p118 = scmp.eq.s32.totalorder %s17, 1
      %p119 = por %p117, %p118
      %p120 = scmp.ne.s32.totalorder %s109, %s110
      %p121 = scmp.eq.s32.totalorder %s17, 0
      %p122 = por %p120, %p121
      %p123 = scmp.ne.s32.totalorder %s109, %s110
      %p124 = scmp.eq.s32.totalorder %s18, 1
      %p125 = por %p123, %p124
      %p127 = scmp.ne.s32.totalorder %s110, %s126
      %p128 = scmp.eq.s32.totalorder %s18, 0
      %p129 = por %p127, %p128
      %p130 = scmp.le.s32.totalorder 1, %s12
      %p131 = scmp.lt.s32.totalorder %s12, 3
      %p132 = pnand %p130, %p131
      %p133 = pneg %p132
      // Predicated region
      $region9: #{tpu_custom_call.1} parent=5 // pred_check
        _
      $region10: #{tpu_custom_call.1} parent=5 // pred_check_branch
        %135 = sbr.rel (%p132) target = $region12
      $region11: #{tpu_custom_call.1} parent=5 // pred_region
        %s136 = ssub.s32 %s12, 1
        // Predicated region
        $region13: #{tpu_custom_call.1} parent=11 // pred_check
          %p137 = pneg %p73
        $region14: #{tpu_custom_call.1} parent=11 // pred_check_branch
          %139 = sbr.rel (%p137) target = $region16
        $region15: #{tpu_custom_call.1} parent=11 // pred_region
          _
        $region16: #{tpu_custom_call.1} parent=11 // pred_fallthru
          _
        // Predicated region
        $region17: #{tpu_custom_call.1} parent=11 // pred_check
          %p140 = pneg %p94
        $region18: #{tpu_custom_call.1} parent=11 // pred_check_branch
          %142 = sbr.rel (%p140) target = $region20
        $region19: #{tpu_custom_call.1} parent=11 // pred_region
          _
        $region20: #{tpu_custom_call.1} parent=11 // pred_fallthru
          _
      $region12: #{tpu_custom_call.1} parent=5 // pred_fallthru
        _
      %p143 = scmp.lt.s32.totalorder %s12, 2
      // Predicated region
      $region21: #{tpu_custom_call.1} parent=5 // pred_check
        %p144 = pneg %p143
      $region22: #{tpu_custom_call.1} parent=5 // pred_check_branch
        %146 = sbr.rel (%p144) target = $region24
      $region23: #{tpu_custom_call.1} parent=5 // pred_region
        // Predicated region
        $region25: #{tpu_custom_call.1} parent=23 // pred_check
          %p147 = pneg %p46
        $region26: #{tpu_custom_call.1} parent=23 // pred_check_branch
          %149 = sbr.rel (%p147) target = $region28
        $region27: #{tpu_custom_call.1} parent=23 // pred_region
          %s150 = smul.u32 2, %s20
          %p151 = scmp.lt.s32.totalorder %s19, 1
          %s152 = scalar_select %p151, %s19, 1
          %p153 = scmp.lt.s32.totalorder %s150, 1
          %s154 = scalar_select %p153, %s150, 1
          %s155 = smul.addr %s152, 2
          %s156 = sadd.s32 %s154, %s155
          %s157 = smul.addr %s156, 4
          %s158 = scalar_lea.vmem %s0, %s157
          %s159 = smul.u32 2, %s20
        $region28: #{tpu_custom_call.1} parent=23 // pred_fallthru
          _
      $region24: #{tpu_custom_call.1} parent=5 // pred_fallthru
        _
      %p160 = scmp.le.s32.totalorder 1, %s12
      %p161 = scmp.lt.s32.totalorder %s12, 3
      %p162 = pnand %p160, %p161
      %p163 = pneg %p162
      // Predicated region
      $region29: #{tpu_custom_call.1} parent=5 // pred_check
        _
      $region30: #{tpu_custom_call.1} parent=5 // pred_check_branch
        %165 = sbr.rel (%p162) target = $region32
      $region31: #{tpu_custom_call.1} parent=5 // pred_region
        %s166 = ssub.s32 %s12, 1
        %s167 = smul.u32 2, %s22
        %p168 = scmp.lt.s32.totalorder %s21, 1
        %s169 = scalar_select %p168, %s21, 1
        %p170 = scmp.lt.s32.totalorder %s167, 1
        %s171 = scalar_select %p170, %s167, 1
        %s172 = smul.addr %s169, 2
        %s173 = sadd.s32 %s171, %s172
        %s174 = smul.addr %s173, 4
        %s175 = scalar_lea.vmem %s0, %s174
        %p176 = pneg %p52
        %p177 = pneg %p49
        %p178 = pneg %p73
        %p179 = pneg %p70
        %p180 = pneg %p94
        %p181 = pneg %p91
        %p182 = pneg %p122
        %p183 = pneg %p119
        %s184 = sand.u32 %s109, 1
        %s185 = scalar_lea.sflag [#allocation3], %s184
        %s186 = sand.u32 %s109, 1
        %s187 = smul.addr %s186, 16
        %s188 = scalar_lea.vmem [#allocation2], %s187
        %s189 = smul.u32 2, %s22
        %p190 = scmp.lt.s32.totalorder %s21, 1
        %s191 = scalar_select %p190, %s21, 1
        %p192 = scmp.lt.s32.totalorder %s189, 1
        %s193 = scalar_select %p192, %s189, 1
        %s194 = smul.addr %s191, 2
        %s195 = sadd.s32 %s193, %s194
        %s196 = smul.addr %s195, 4
        %s197 = scalar_lea.vmem %s0, %s196
        %s198 = smul.u32 2, %s22
        %s199 = smul.u32 2, %s22
        %v200 = vld [vmem:[%s1] sm:$0xff]
        %v201 = vld [vmem:[%s197] sm:$0xff]
        %v202 = vld [vmem:[%s2] sm:$0xff]
        %204 = vset.pattern.permute.xlu0 0
        %205 = vperm.xlu0 %204, %v202
        %v206 = vpop.permute.xlu0 %205
        %v209 = vcombine.high %v201, %v201
        %vm210 = vcmask 31744
        %v212 = vsel %vm210, %v200, 0
        %vm214 = vcmask 1043456
        %v215 = vsel %vm214, %v201, 0
        %v217 = vsel %vm214, %v209, 0
        %219 = vmatprep.subr.mxu0 0.0
        %220 = vmatpush1.msra.mxu0 0.0
        %221 = vmatprep.subr.mxu0 0.0
        %222 = vmatpush1.msra.mxu0 0.0
        %223 = vmatprep.subr.mxu0 0.0
        %224 = vmatpush1.msra.mxu0 0.0
        %225 = vmatprep.subr.mxu0 0.0
        %226 = vmatpush1.msra.mxu0 0.0
        %227 = vmatprep.subr.mxu0 0.0
        %228 = vmatpush1.msra.mxu0 0.0
        %229 = vmatprep.subr.mxu0 0.0
        %230 = vmatpush1.msra.mxu0 0.0
        %231 = vmatprep.subr.mxu0 0.0
        %232 = vmatpush1.msra.mxu0 0.0
        %233 = vmatprep.subr.mxu0 0.0
        %234 = vmatpush1.msra.mxu0 0.0
        %235 = vmatprep.subr.mxu0 0.0
        %236 = vmatpush1.msra.mxu0 0.0
        %237 = vmatprep.subr.mxu0 0.0
        %238 = vmatpush1.msra.mxu0 0.0
        %239 = vmatprep.subr.mxu0 0.0
        %240 = vmatpush1.msra.mxu0 0.0
        %241 = vmatprep.subr.mxu0 0.0
        %242 = vmatpush1.msra.mxu0 0.0
        %243 = vmatprep.subr.mxu0 0.0
        %244 = vmatpush1.msra.mxu0 0.0
        %245 = vmatprep.subr.mxu0 0.0
        %246 = vmatpush1.msra.mxu0 0.0
        %247 = vmatprep.subr.mxu0 0.0
        %248 = vmatpush1.msra.mxu0 0.0
        %249 = vmatprep.subr.mxu0 %v217
        %250 = vmatpush1.msra.mxu0 %v215
        %251 = vmatprep.subr.mxu0 0.0
        %252 = vmatpush2.msra.mxu0 0.0
        %253 = vmatprep.subr.mxu0 0.0
        %254 = vmatpush2.msra.mxu0 0.0
        %255 = vmatprep.subr.mxu0 0.0
        %256 = vmatpush2.msra.mxu0 0.0
        %257 = vmatprep.subr.mxu0 0.0
        %258 = vmatpush2.msra.mxu0 0.0
        %259 = vmatprep.subr.mxu0 0.0
        %260 = vmatpush2.msra.mxu0 0.0
        %261 = vmatprep.subr.mxu0 0.0
        %262 = vmatpush2.msra.mxu0 0.0
        %263 = vmatprep.subr.mxu0 0.0
        %264 = vmatpush2.msra.mxu0 0.0
        %265 = vmatprep.subr.mxu0 0.0
        %266 = vmatpush2.msra.mxu0 0.0
        %267 = vmatprep.subr.mxu0 0.0
        %268 = vmatpush2.msra.mxu0 0.0
        %269 = vmatprep.subr.mxu0 0.0
        %270 = vmatpush2.msra.mxu0 0.0
        %271 = vmatprep.subr.mxu0 0.0
        %272 = vmatpush2.msra.mxu0 0.0
        %273 = vmatprep.subr.mxu0 0.0
        %274 = vmatpush2.msra.mxu0 0.0
        %275 = vmatprep.subr.mxu0 0.0
        %276 = vmatpush2.msra.mxu0 0.0
        %277 = vmatprep.subr.mxu0 0.0
        %278 = vmatpush2.msra.mxu0 0.0
        %279 = vmatprep.subr.mxu0 0.0
        %280 = vmatpush2.msra.mxu0 0.0
        %281 = vmatprep.subr.mxu0 0.0
        %282 = vmatpush2.msra.mxu0 0.0
        %283 = vmatprep.mubr.f32.mxu0 0.0
        %284 = vmatmul.mubr.f32.gmra.mxu0 %v212
        %v285 = vpop.f32.mrf.mxu0
        %v286 = vadd.f32 %v206, %v285
        %v287 = vpop.f32.mrf.mxu0
        %v288 = vadd.f32 %v206, %v287
        %289 = vdwg.mxu0
        %290 = vst [vmem:[%s188] sm:$0xff] %v286
        %291 = vst [vmem:[%s188 + $0x8] sm:$0xff] %v288
        %s292 = sand.u32 %s109, 1
        %s293 = scalar_lea.sflag [#allocation3], %s292
        %s294 = sand.u32 %s109, 1
        %s295 = smul.addr %s294, 16
        %s296 = scalar_lea.vmem [#allocation2], %s295
        // Predicated region
        $region33: #{tpu_custom_call.1} parent=31 // pred_check
          %p297 = pneg %p119
        $region34: #{tpu_custom_call.1} parent=31 // pred_check_branch
          %299 = sbr.rel (%p297) target = $region36
        $region35: #{tpu_custom_call.1} parent=31 // pred_region
          %s300 = smul.u32 2, %s22
          %s302 = ssub.s32 256, 256
          %303 = vsyncadd %s293, %s302
          %s304 = smul.addr %s21, 2
          %s305 = sadd.s32 %s300, %s304
          %s306 = smul.addr %s305, 128
          %s307 = scalar_lea.hbm %s3, %s306
          %s309 = sshll.u32 %s296, 4
          %s310 = int_to_ptr.vmem [resolvable:$true] %s309
          %312 = dma.vmem_to_hbm [thread:$0]  %s310, 256, %s307, %s293
        $region36: #{tpu_custom_call.1} parent=31 // pred_fallthru
          _
      $region32: #{tpu_custom_call.1} parent=5 // pred_fallthru
        _
      %p313 = scmp.le.s32.totalorder 2, %s12
      // Predicated region
      $region37: #{tpu_custom_call.1} parent=5 // pred_check
        %p314 = pneg %p313
      $region38: #{tpu_custom_call.1} parent=5 // pred_check_branch
        %316 = sbr.rel (%p314) target = $region40
      $region39: #{tpu_custom_call.1} parent=5 // pred_region
        %s317 = ssub.s32 %s12, 2
        // Predicated region
        $region41: #{tpu_custom_call.1} parent=39 // pred_check
          %p318 = pneg %p125
        $region42: #{tpu_custom_call.1} parent=39 // pred_check_branch
          %320 = sbr.rel (%p318) target = $region44
        $region43: #{tpu_custom_call.1} parent=39 // pred_region
          %s321 = sand.u32 %s110, 1
          %s322 = scalar_lea.sflag [#allocation3], %s321
          %s323 = sand.u32 %s110, 1
          %s324 = smul.addr %s323, 16
          %s325 = scalar_lea.vmem [#allocation2], %s324
          %326 = dma.done %s322, 256
        $region44: #{tpu_custom_call.1} parent=39 // pred_fallthru
          _
      $region40: #{tpu_custom_call.1} parent=5 // pred_fallthru
        _
    $region6: #{tpu_custom_call.1} parent=1 // loop_footer
      %s16 = sadd.s32 1, %s12
    $region7: #{tpu_custom_call.1} parent=1 // loop_footer_branch
      %11 = sbr.rel target = $region3
    $region8: #{tpu_custom_call.1} parent=1 // loop_exit
      _
    %327 = vsyncpa [#allocation3], 1
    %s328 = scalar_lea.sflag [#allocation3], 1
    %329 = vsyncpa %s328, 1

</llo_original>
